<compile_context>
chip_gen: v6e
topology: v6e:2x2x1
jax: 0.10.0
libtpu: 0.0.40
codegen_flags: <defaults>
</compile_context>

<pallas_src>
import jax
import jax.numpy as jnp
from jax.experimental import pallas as pl
from jax.experimental.pallas import tpu as pltpu


def _round_up(n, m):
    return ((n + m - 1) // m) * m


def _round_down(n, m):
    return (n // m) * m


def _logreg_kernel(x_ref, w_ref, b_ref, o_ref):
    # x_ref: (TB, F) caller dtype; w_ref: (F, 1) f32; b_ref: (1, 1) f32 in
    # SMEM; o_ref: (TB, 1) f32.
    x = x_ref[...].astype(jnp.float32)          # cast after load (bf16-friendly)
    # Contraction on the MXU (vector-extended slot).  Keeps the XLU free on
    # v6e/v7x where a per-row lane reduction would be the saturating slot.
    z = jnp.dot(x, w_ref[...], preferred_element_type=jnp.float32)   # (TB, 1)
    z = z + b_ref[0, 0]                         # scalar bias from SMEM
    # Numerically stable sigmoid on the EUP: sigmoid(z) = 0.5*(tanh(z/2)+1).
    o_ref[...] = 0.5 * (jnp.tanh(0.5 * z) + 1.0)


def logistic_regression(x, w, b, *, tb=None,
                        target_tile_bytes=4 << 20,
                        vmem_budget_bytes=28 << 20,
                        vmem_limit_bytes=56 << 20):
    """sigmoid(x @ w + b).  x: (B, F); w: (F, 1) (or (1, F)); b: (1,) -> (B, 1) f32."""
    B, F = x.shape
    w_col = jnp.asarray(w, dtype=jnp.float32).reshape(F, 1)
    b2d = jnp.asarray(b, dtype=jnp.float32).reshape(1, 1)

    itemsize = jnp.dtype(x.dtype).itemsize
    row_bytes = F * itemsize
    # Per-row double-buffered VMEM cost:
    #   x tile:   2 buffers * F * itemsize
    #   out tile: 2 buffers * 128 lanes * 4 B  (a (tb,1) f32 block is laid out
    #             as (tb,128) VMEM tiles -> must be budgeted, esp. on v7x)
    buf_row_bytes = 2 * row_bytes + 2 * 128 * 4

    if tb is None:
        tb = max(32, target_tile_bytes // row_bytes)                 # byte-sized tile
        tb = min(tb, max(32, vmem_budget_bytes // buf_row_bytes))    # VMEM budget
        # Keep >= ~8 grid steps for large batches so v7x's two TensorCores
        # split the batch axis and double-buffering actually hides DMA.
        tb = min(tb, max(256, _round_up(pl.cdiv(B, 8), 32)))
    tb = max(32, _round_down(int(tb), 32))    # multiple of 32: f32/bf16/int8 tiling
    if tb >= B:
        tb = B                                # single block == full array dim

    grid = pl.cdiv(B, tb)  # ragged batch: last block clipped by Pallas, no pad copy

    out = pl.pallas_call(
        _logreg_kernel,
        out_shape=jax.ShapeDtypeStruct((B, 1), jnp.float32),
        grid_spec=pl.GridSpec(
            grid=(grid,),
            in_specs=[
                pl.BlockSpec((tb, F), lambda i: (i, 0)),             # stream x
                pl.BlockSpec((F, 1), lambda i: (0, 0)),              # resident w
                pl.BlockSpec(memory_space=pltpu.MemorySpace.SMEM),   # scalar bias
            ],
            out_specs=pl.BlockSpec((tb, 1), lambda i: (i, 0)),
        ),
        compiler_params=pltpu.CompilerParams(
            dimension_semantics=("parallel",),   # shard batch over TCs (v7x)
            vmem_limit_bytes=vmem_limit_bytes,   # explicit: v5e default is 16 MiB
        ),
    )(x, w_col, b2d)
    return out


if __name__ == "__main__":
    key = jax.random.PRNGKey(0)
    kx, kw, kb, kx2 = jax.random.split(key, 4)

    # Small shapes consistent with the module: batch=8, n_input_features=32.
    B, F = 8, 32
    x = jax.random.normal(kx, (B, F), dtype=jnp.float32)

    # Deterministic nn.Linear-style init: U(-1/sqrt(F), 1/sqrt(F)).
    bound = 1.0 / jnp.sqrt(jnp.float32(F))
    w = jax.random.uniform(kw, (F, 1), minval=-bound, maxval=bound,
                           dtype=jnp.float32)
    b = jax.random.uniform(kb, (1,), minval=-bound, maxval=bound,
                           dtype=jnp.float32)

    out = jax.block_until_ready(logistic_regression(x, w, b))
    ref = jax.nn.sigmoid(
        jnp.dot(x, w, precision=jax.lax.Precision.HIGHEST) + b[0])
    assert out.shape == (B, 1)
    # Tolerance covers MXU f32 pass-decomposition differences vs the XLA ref.
    assert jnp.allclose(out, ref, atol=5e-3, rtol=5e-3)

    # Ragged-batch path: grid = cdiv(200, 64) with a clipped final block
    # (exercises the no-pad streaming path end to end).
    B2 = 200
    x2 = jax.random.normal(kx2, (B2, F), dtype=jnp.float32)
    out2 = jax.block_until_ready(logistic_regression(x2, w, b, tb=64))
    ref2 = jax.nn.sigmoid(
        jnp.dot(x2, w, precision=jax.lax.Precision.HIGHEST) + b[0])
    assert out2.shape == (B2, 1)
    assert jnp.allclose(out2, ref2, atol=5e-3, rtol=5e-3)

    print("KERNEL_OK")
</pallas_src>

<mosaic_0001>
module attributes {stable_mosaic.version = 11 : i64} {
  func.func @_logreg_kernel(%arg0: i32, %arg1: memref<8x32xf32, #tpu.memory_space<vmem>>, %arg2: memref<32x1xf32, #tpu.memory_space<vmem>>, %arg3: memref<1x1xf32, #tpu.memory_space<smem>>, %arg4: memref<8x1xf32, #tpu.memory_space<vmem>>) attributes {dimension_semantics = [#tpu.dimension_semantics<parallel>], iteration_bounds = array<i64: 1>, scalar_prefetch = 0 : i64, scratch_operands = 0 : i64, tpu.core_type = #tpu.core_type<tc>, window_params = [{transform_indices = @transform_0, window_bounds = array<i64: 8, 32>}, {pipeline_mode = #tpu.pipeline_mode<synchronous>, transform_indices = @transform_1, window_bounds = array<i64: 32, 1>}, {transform_indices = @transform_2, window_bounds = array<i64: 1, 1>}, {transform_indices = @transform_3, window_bounds = array<i64: 8, 1>}]} {
    %c0 = arith.constant 0 : index
    %c0_0 = arith.constant 0 : index
    %0 = vector.load %arg1[%c0, %c0_0] : memref<8x32xf32, #tpu.memory_space<vmem>>, vector<8x32xf32>
    %c0_1 = arith.constant 0 : index
    %c0_2 = arith.constant 0 : index
    %1 = vector.load %arg2[%c0_1, %c0_2] : memref<32x1xf32, #tpu.memory_space<vmem>>, vector<32x1xf32>
    %cst = arith.constant dense<0.000000e+00> : vector<8x1xf32>
    %2 = tpu.matmul %0, %1, %cst {dimension_numbers = #tpu.dot_dimension_numbers<[1], [0], [0], [1], [0, 0, 1, 1], [], []>} : vector<8x32xf32>, vector<32x1xf32>, vector<8x1xf32> -> vector<8x1xf32>
    %c0_3 = arith.constant 0 : index
    %c0_4 = arith.constant 0 : index
    %3 = memref.load %arg3[%c0_3, %c0_4] : memref<1x1xf32, #tpu.memory_space<smem>>
    %4 = vector.broadcast %3 : f32 to vector<8x1xf32>
    %5 = arith.addf %2, %4 : vector<8x1xf32>
    %cst_5 = arith.constant 5.000000e-01 : f32
    %6 = vector.broadcast %cst_5 : f32 to vector<8x1xf32>
    %7 = arith.mulf %6, %5 : vector<8x1xf32>
    %8 = math.tanh %7 : vector<8x1xf32>
    %cst_6 = arith.constant 1.000000e+00 : f32
    %9 = vector.broadcast %cst_6 : f32 to vector<8x1xf32>
    %10 = arith.addf %8, %9 : vector<8x1xf32>
    %cst_7 = arith.constant 5.000000e-01 : f32
    %11 = vector.broadcast %cst_7 : f32 to vector<8x1xf32>
    %12 = arith.mulf %11, %10 : vector<8x1xf32>
    %c0_8 = arith.constant 0 : index
    %c0_9 = arith.constant 0 : index
    %13 = vector.load %arg4[%c0_8, %c0_9] : memref<8x1xf32, #tpu.memory_space<vmem>>, vector<8x1xf32>
    tpu.vector_store %arg4[%c0_8, %c0_9], %12 {strides = array<i32>} : memref<8x1xf32, #tpu.memory_space<vmem>>, vector<8x1xf32>,
    return
  }
  func.func @transform_0(%arg0: i32) -> (i32, i32) {
    %c0_i32 = arith.constant 0 : i32
    %c0_i32_0 = arith.constant 0 : i32
    return %arg0, %c0_i32 : i32, i32
  }
  func.func @transform_1(%arg0: i32) -> (i32, i32) {
    %c0_i32 = arith.constant 0 : i32
    %c0_i32_0 = arith.constant 0 : i32
    %c0_i32_1 = arith.constant 0 : i32
    return %c0_i32, %c0_i32_0 : i32, i32
  }
  func.func @transform_2(%arg0: i32) -> (i32, i32) {
    %c0_i32 = arith.constant 0 : i32
    %c0_i32_0 = arith.constant 0 : i32
    %c0_i32_1 = arith.constant 0 : i32
    return %c0_i32, %c0_i32_0 : i32, i32
  }
  func.func @transform_3(%arg0: i32) -> (i32, i32) {
    %c0_i32 = arith.constant 0 : i32
    %c0_i32_0 = arith.constant 0 : i32
    return %arg0, %c0_i32 : i32, i32
  }
}

</mosaic_0001>

<llo_original>
// kernel: tpu_custom_call.1
$region0: #{tpu_custom_call.1}
  #allocation0 [shape = 'u32[]', space=smem, size = 0x4, offset = 0x4, fixed_abs, tag = 'smem constant byte address 0x4 - core index']
  #allocation1 [shape = 'u32[144,128]{1,0:T(1,128)}', space=vmem, size = 0x12000, scoped, tag = 'internal scratch']
  #allocation2 [shape = 'f32[1,1]{1,0:T(1,128)S(6)}', space=smem, size = 0x200, scoped, tag = 'scoped memory for tpu_custom_call.1']
  %s0 = inlined_call_operand.vmem [shape: f32[8,32], index: 0, kind: input, shape index: {}]
  %s1 = inlined_call_operand.vmem [shape: f32[32,1], index: 1, kind: input, shape index: {}]
  %s2 = inlined_call_operand.<no memory space> [shape: f32[1,1], index: 2, kind: input, shape index: {}]
  %s3 = inlined_call_operand.vmem [shape: f32[8,1], index: 3, kind: output, shape index: {}]
  %s4 = sld [smem:[#allocation0]]
  $region22: #{tpu_custom_call.1} parent=0
    _
  %s6 = ssub.s32 1, %s4
  %s7 = scalar_select 0, %s6, %s4
  %8 = sst [smem:[#allocation2]] %s2
  // Predicated region
  $region2: #{tpu_custom_call.1} parent=0 // pred_check
    _
  $region3: #{tpu_custom_call.1} parent=0 // pred_check_branch
    %10 = sbr.rel (0) target = $region5
  $region4: #{tpu_custom_call.1} parent=0 // pred_region
    _
  $region5: #{tpu_custom_call.1} parent=0 // pred_fallthru
    _
  // Predicated region
  $region6: #{tpu_custom_call.1} parent=0 // pred_check
    _
  $region7: #{tpu_custom_call.1} parent=0 // pred_check_branch
    %12 = sbr.rel (0) target = $region9
  $region8: #{tpu_custom_call.1} parent=0 // pred_region
    _
  $region9: #{tpu_custom_call.1} parent=0 // pred_fallthru
    _
  // Predicated region
  $region10: #{tpu_custom_call.1} parent=0 // pred_check
    _
  $region11: #{tpu_custom_call.1} parent=0 // pred_check_branch
    %14 = sbr.rel (0) target = $region13
  $region12: #{tpu_custom_call.1} parent=0 // pred_region
    _
  $region13: #{tpu_custom_call.1} parent=0 // pred_fallthru
    _
  %v15 = vld [vmem:[%s0] sm:$0xff]
  %v16 = vld [vmem:[%s1] sm:$0xff]
  %v17 = vld [vmem:[%s1 + $0x8] sm:$0xff]
  %v18 = vld [vmem:[%s1 + $0x10] sm:$0xff]
  %v19 = vld [vmem:[%s1 + $0x18] sm:$0xff]
  %s20 = sld [smem:[#allocation2]]
  %v21 = vstv %s20
  %vm22 = vcmask 261120
  %v24 = vsel %vm22, %v15, 0
  %26 = vmatprep.subr.mxu0 0.0
  %27 = vmatpush1.msra.mxu0 0.0
  %28 = vmatprep.subr.mxu0 0.0
  %29 = vmatpush1.msra.mxu0 0.0
  %30 = vmatprep.subr.mxu0 0.0
  %31 = vmatpush1.msra.mxu0 0.0
  %32 = vmatprep.subr.mxu0 0.0
  %33 = vmatpush1.msra.mxu0 0.0
  %34 = vmatprep.subr.mxu0 0.0
  %35 = vmatpush1.msra.mxu0 0.0
  %36 = vmatprep.subr.mxu0 0.0
  %37 = vmatpush1.msra.mxu0 0.0
  %38 = vmatprep.subr.mxu0 0.0
  %39 = vmatpush1.msra.mxu0 0.0
  %40 = vmatprep.subr.mxu0 0.0
  %41 = vmatpush1.msra.mxu0 0.0
  %42 = vmatprep.subr.mxu0 0.0
  %43 = vmatpush1.msra.mxu0 0.0
  %44 = vmatprep.subr.mxu0 0.0
  %45 = vmatpush1.msra.mxu0 0.0
  %46 = vmatprep.subr.mxu0 0.0
  %47 = vmatpush1.msra.mxu0 0.0
  %48 = vmatprep.subr.mxu0 0.0
  %49 = vmatpush1.msra.mxu0 0.0
  %50 = vmatprep.subr.mxu0 0.0
  %51 = vmatpush1.msra.mxu0 %v19
  %52 = vmatprep.subr.mxu0 0.0
  %53 = vmatpush1.msra.mxu0 %v18
  %54 = vmatprep.subr.mxu0 0.0
  %55 = vmatpush1.msra.mxu0 %v17
  %56 = vmatprep.subr.mxu0 0.0
  %57 = vmatpush1.msra.mxu0 %v16
  %58 = vmatprep.subr.mxu0 0.0
  %59 = vmatpush2.msra.mxu0 0.0
  %60 = vmatprep.subr.mxu0 0.0
  %61 = vmatpush2.msra.mxu0 0.0
  %62 = vmatprep.subr.mxu0 0.0
  %63 = vmatpush2.msra.mxu0 0.0
  %64 = vmatprep.subr.mxu0 0.0
  %65 = vmatpush2.msra.mxu0 0.0
  %66 = vmatprep.subr.mxu0 0.0
  %67 = vmatpush2.msra.mxu0 0.0
  %68 = vmatprep.subr.mxu0 0.0
  %69 = vmatpush2.msra.mxu0 0.0
  %70 = vmatprep.subr.mxu0 0.0
  %71 = vmatpush2.msra.mxu0 0.0
  %72 = vmatprep.subr.mxu0 0.0
  %73 = vmatpush2.msra.mxu0 0.0
  %74 = vmatprep.subr.mxu0 0.0
  %75 = vmatpush2.msra.mxu0 0.0
  %76 = vmatprep.subr.mxu0 0.0
  %77 = vmatpush2.msra.mxu0 0.0
  %78 = vmatprep.subr.mxu0 0.0
  %79 = vmatpush2.msra.mxu0 0.0
  %80 = vmatprep.subr.mxu0 0.0
  %81 = vmatpush2.msra.mxu0 0.0
  %82 = vmatprep.subr.mxu0 0.0
  %83 = vmatpush2.msra.mxu0 0.0
  %84 = vmatprep.subr.mxu0 0.0
  %85 = vmatpush2.msra.mxu0 0.0
  %86 = vmatprep.subr.mxu0 0.0
  %87 = vmatpush2.msra.mxu0 0.0
  %88 = vmatprep.subr.mxu0 0.0
  %89 = vmatpush2.msra.mxu0 0.0
  %90 = vmatprep.mubr.f32.mxu0 0.0
  %91 = vmatmul.mubr.f32.gmra.mxu0 %v24
  %v92 = vpop.f32.mrf.mxu0
  %v93 = vadd.f32 %v21, %v92
  %v94 = vpop.f32.mrf.mxu0
  %95 = vdwg.mxu0
  %v96 = vmul.f32 %v93, 0.5
  %v97 = vtanh.pop %v96
  %v98 = vadd.f32 %v97, 1.0
  %v99 = vmul.f32 %v98, 0.5
  %vm100 = vcmask 7168
  %101 = vst.msk [vmem:[%s3] sm:$0xff] %vm100, %v99
  // Predicated region
  $region14: #{tpu_custom_call.1} parent=0 // pred_check
    _
  $region15: #{tpu_custom_call.1} parent=0 // pred_check_branch
    %103 = sbr.rel (0) target = $region17
  $region16: #{tpu_custom_call.1} parent=0 // pred_region
    _
  $region17: #{tpu_custom_call.1} parent=0 // pred_fallthru
    _
  // Predicated region
  $region18: #{tpu_custom_call.1} parent=0 // pred_check
    _
  $region19: #{tpu_custom_call.1} parent=0 // pred_check_branch
    %105 = sbr.rel (0) target = $region21
  $region20: #{tpu_custom_call.1} parent=0 // pred_region
    _
  $region21: #{tpu_custom_call.1} parent=0 // pred_fallthru
    _

</llo_original>
